<compile_context>
chip_gen: v5e
topology: v5e:2x2
jax: 0.10.0
libtpu: 0.0.40
codegen_flags: <defaults>
</compile_context>

<pallas_src>
import functools

import jax
import jax.numpy as jnp
from jax import lax
from jax.experimental import pallas as pl
from jax.experimental.pallas import tpu as pltpu

_MIB = 1024 * 1024


def _cdiv(a, b):
    return (a + b - 1) // b


def _round_up(a, b):
    return _cdiv(a, b) * b


def _modesty_loss_kernel(t_ref, x_ref, lbl_ref, corr_out, score_out,
                         corr_acc, score_acc, *,
                         n_total, tile_n, chunk_n, blocks_per_shard):
    s = pl.program_id(0)          # parallel shard (a TensorCore on v7x)
    i = pl.program_id(1)          # reduction step within the shard

    @pl.when(i == 0)
    def _():
        corr_acc[...] = jnp.zeros_like(corr_acc)
        score_acc[...] = jnp.zeros_like(score_acc)

    num_classes = x_ref.shape[1]
    inv_t = 1.0 / t_ref[0]                        # hoisted scalar reciprocal
    block_row0 = (s * blocks_per_shard + i) * tile_n
    num_chunks = tile_n // chunk_n                # static

    def chunk_body(j, carry):
        corr, score = carry
        r0 = pl.multiple_of(j * chunk_n, chunk_n)

        xn = x_ref[pl.ds(r0, chunk_n), :]         # native-dtype logits chunk
        lbl = lbl_ref[pl.ds(r0, chunk_n), :]      # (chunk_n, 1) int32

        # Row max / argmax on the raw native-dtype logits (argmax is invariant
        # under the positive 1/T scale); first index wins on ties.
        row_max = jnp.max(xn, axis=1, keepdims=True)
        idx = lax.broadcasted_iota(jnp.int32, xn.shape, 1)
        masked_idx = jnp.where(xn == row_max, idx, jnp.int32(num_classes))
        prediction = jnp.min(masked_idx, axis=1, keepdims=True)

        # max prob of softmax(x / T) row = 1 / sum_c exp((x_c - max) / T).
        z = (xn.astype(jnp.float32) - row_max.astype(jnp.float32)) * inv_t
        denom = jnp.sum(jnp.exp(z), axis=1, keepdims=True)
        scores = pl.reciprocal(denom)             # exact reciprocal

        correct = (prediction == lbl).astype(jnp.float32)

        # Mask rows past the true batch (ragged last block / duplicated
        # clamped blocks of the second shard).  Keep selects, not arithmetic
        # masking, so garbage/NaN rows cannot propagate.
        row_ids = (block_row0 + r0
                   + lax.broadcasted_iota(jnp.int32, (chunk_n, 1), 0))
        valid = row_ids < n_total
        scores = jnp.where(valid, scores, 0.0)
        correct = jnp.where(valid, correct, 0.0)

        corr = corr + jnp.sum(correct, axis=0, keepdims=True)
        score = score + jnp.sum(scores, axis=0, keepdims=True)
        return corr, score

    zero = jnp.zeros((1, 1), jnp.float32)
    corr, score = lax.fori_loop(0, num_chunks, chunk_body, (zero, zero))

    corr_acc[...] += corr
    score_acc[...] += score

    @pl.when(i == pl.num_programs(1) - 1)
    def _():
        corr_out[...] = corr_acc[...].reshape(1, 1, 1)
        score_out[...] = score_acc[...].reshape(1, 1, 1)


def modesty_loss(inputs, label, T, *, num_shards=2, chunk_rows=256):
    """inputs: (N, C) logits (any float dtype); label: (N,) ints; T: scalar > 0."""
    n, c = inputs.shape
    itemsize = jnp.dtype(inputs.dtype).itemsize

    # --- Per-generation VMEM budget (v7x: 64 MiB physical; v5e/v6e: 128 MiB).
    try:
        phys_vmem = int(pltpu.get_tpu_info().vmem_capacity_bytes)
    except Exception:
        phys_vmem = 64 * _MIB
    big_vmem = phys_vmem >= 128 * _MIB
    vmem_limit = 64 * _MIB if big_vmem else 32 * _MIB
    target_block_bytes = 4 * _MIB if big_vmem else 2 * _MIB

    # --- Row-tile sizing by BYTES, not a fixed row count.
    chunk_n = max(8, (chunk_rows // 8) * 8)
    if n <= chunk_n:
        # Tiny problem: a single block / single chunk covering the batch.
        tile_n = n
        chunk_n = n
        num_shards = 1
    else:
        row_logits = c * itemsize
        # Per-row VMEM, double-buffered: logits block plus the (rows, 1) int32
        # label block whose lane-padded tiled layout costs ~512 B/row.
        per_row_vmem = 2 * row_logits + 2 * 512
        budget = max(2 * _MIB, vmem_limit - 8 * _MIB)    # headroom for temps
        cap_rows = min(budget // per_row_vmem,
                       max(8, target_block_bytes // row_logits),
                       8192)
        if cap_rows < chunk_n:            # very wide rows (huge class count)
            chunk_n = max(8, (cap_rows // 8) * 8)
            tile_n = chunk_n
        else:
            cap_rows = (cap_rows // chunk_n) * chunk_n
            want_rows = _round_up(_cdiv(n, max(1, num_shards)), chunk_n)
            floor_rows = max(chunk_n, (n // chunk_n) * chunk_n)
            tile_n = max(chunk_n, min(cap_rows, want_rows, floor_rows))

    total_blocks = _cdiv(n, tile_n)
    num_shards = max(1, min(num_shards, total_blocks))
    blocks_per_shard = _cdiv(total_blocks, num_shards)
    last_block = total_blocks - 1
    grid = (num_shards, blocks_per_shard)

    t_arr = jnp.asarray([T], dtype=jnp.float32)
    label2d = label.astype(jnp.int32).reshape(n, 1)

    kernel = functools.partial(
        _modesty_loss_kernel,
        n_total=n, tile_n=tile_n, chunk_n=chunk_n,
        blocks_per_shard=blocks_per_shard)

    def row_block(s, i):
        # Clamp so blocks past the array edge (duplicated work of the second
        # shard on small inputs) re-read a valid block; those rows are masked
        # out in-kernel via their logical row ids.
        return (jnp.minimum(s * blocks_per_shard + i, last_block), 0)

    cost = pl.CostEstimate(
        flops=6 * n * c,
        transcendentals=n * c,
        bytes_accessed=n * c * itemsize + n * 4 + 8 * num_shards,
    )

    corr_parts, score_parts = pl.pallas_call(
        kernel,
        out_shape=(
            jax.ShapeDtypeStruct((num_shards, 1, 1), jnp.float32),
            jax.ShapeDtypeStruct((num_shards, 1, 1), jnp.float32),
        ),
        grid=grid,
        in_specs=[
            pl.BlockSpec(memory_space=pltpu.MemorySpace.SMEM),   # T (scalar)
            pl.BlockSpec((tile_n, c), row_block),                # logits tile
            pl.BlockSpec((tile_n, 1), row_block),                # label tile
        ],
        out_specs=(
            pl.BlockSpec((1, 1, 1), lambda s, i: (s, 0, 0)),     # correct sum
            pl.BlockSpec((1, 1, 1), lambda s, i: (s, 0, 0)),     # score sum
        ),
        scratch_shapes=[
            pltpu.VMEM((1, 1), jnp.float32),                     # correct acc
            pltpu.VMEM((1, 1), jnp.float32),                     # score acc
        ],
        compiler_params=pltpu.CompilerParams(
            dimension_semantics=("parallel", "arbitrary"),
            vmem_limit_bytes=vmem_limit,
        ),
        cost_estimate=cost,
    )(t_arr, inputs, label2d)

    inv_n = jnp.float32(1.0 / n)
    acc = jnp.sum(corr_parts) * inv_n
    proba = jnp.sum(score_parts) * inv_n
    return (acc - proba) ** 2


def _reference(inputs, label, T):
    probs = jax.nn.softmax(inputs.astype(jnp.float32) / T, axis=1)
    scores = jnp.max(probs, axis=1)
    prediction = jnp.argmax(probs, axis=1)
    acc = jnp.mean((prediction == label).astype(jnp.float32))
    proba = jnp.mean(scores)
    return (acc - proba) ** 2


if __name__ == "__main__":
    key = jax.random.PRNGKey(0)
    k1, k2 = jax.random.split(key)

    N, C = 8, 16          # small batch of 8 samples, 16 classes
    T = 1.5

    inputs = jax.random.normal(k1, (N, C), dtype=jnp.float32)
    label = jax.random.randint(k2, (N,), 0, C, dtype=jnp.int32)

    loss = modesty_loss(inputs, label, T)
    jax.block_until_ready(loss)

    ref = _reference(inputs, label, T)
    assert jnp.allclose(loss, ref, atol=1e-5, rtol=1e-5), (loss, ref)

    print("KERNEL_OK")
</pallas_src>

<mosaic_0001>
module attributes {stable_mosaic.version = 11 : i64} {
  func.func @_modesty_loss_kernel(%arg0: i32, %arg1: i32, %arg2: memref<1xf32, #tpu.memory_space<smem>>, %arg3: memref<8x16xf32, #tpu.memory_space<vmem>>, %arg4: memref<8x1xi32, #tpu.memory_space<vmem>>, %arg5: memref<1x1x1xf32, #tpu.memory_space<vmem>>, %arg6: memref<1x1x1xf32, #tpu.memory_space<vmem>>, %arg7: memref<1x1xf32, #tpu.memory_space<vmem>>, %arg8: memref<1x1xf32, #tpu.memory_space<vmem>>) attributes {dimension_semantics = [#tpu.dimension_semantics<parallel>, #tpu.dimension_semantics<arbitrary>], iteration_bounds = array<i64: 1, 1>, scalar_prefetch = 0 : i64, scratch_operands = 2 : i64, tpu.core_type = #tpu.core_type<tc>, window_params = [{transform_indices = @transform_0, window_bounds = array<i64: 1>}, {transform_indices = @transform_1, window_bounds = array<i64: 8, 16>}, {transform_indices = @transform_2, window_bounds = array<i64: 8, 1>}, {transform_indices = @transform_3, window_bounds = array<i64: 1, 1, 1>}, {transform_indices = @transform_4, window_bounds = array<i64: 1, 1, 1>}]} {
    %c0_i32 = arith.constant 0 : i32
    %0 = arith.cmpi eq, %arg1, %c0_i32 : i32
    %1 = arith.extui %0 : i1 to i32
    %c0_i32_0 = arith.constant 0 : i32
    %2 = arith.cmpi ne, %1, %c0_i32_0 : i32
    scf.if %2 {
      %cst_25 = arith.constant 0.000000e+00 : f32
      %60 = vector.broadcast %cst_25 : f32 to vector<1x1xf32>
      %c0_26 = arith.constant 0 : index
      %c0_27 = arith.constant 0 : index
      %61 = vector.load %arg7[%c0_26, %c0_27] : memref<1x1xf32, #tpu.memory_space<vmem>>, vector<1x1xf32>
      tpu.vector_store %arg7[%c0_26, %c0_27], %60 {strides = array<i32>} : memref<1x1xf32, #tpu.memory_space<vmem>>, vector<1x1xf32>,
      %cst_28 = arith.constant 0.000000e+00 : f32
      %62 = vector.broadcast %cst_28 : f32 to vector<1x1xf32>
      %c0_29 = arith.constant 0 : index
      %c0_30 = arith.constant 0 : index
      %63 = vector.load %arg8[%c0_29, %c0_30] : memref<1x1xf32, #tpu.memory_space<vmem>>, vector<1x1xf32>
      tpu.vector_store %arg8[%c0_29, %c0_30], %62 {strides = array<i32>} : memref<1x1xf32, #tpu.memory_space<vmem>>, vector<1x1xf32>,
    } else {
    }
    %c0 = arith.constant 0 : index
    %3 = memref.load %arg2[%c0] : memref<1xf32, #tpu.memory_space<smem>>
    %cst = arith.constant 1.000000e+00 : f32
    %4 = arith.divf %cst, %3 : f32
    %c1_i32 = arith.constant 1 : i32
    %5 = arith.muli %arg0, %c1_i32 : i32
    %6 = arith.addi %5, %arg1 : i32
    %c8_i32 = arith.constant 8 : i32
    %7 = arith.muli %6, %c8_i32 : i32
    %cst_1 = arith.constant 0.000000e+00 : f32
    %8 = vector.broadcast %cst_1 : f32 to vector<1x1xf32>
    %c0_i32_2 = arith.constant 0 : i32
    %c8_i32_3 = arith.constant 8 : i32
    %9 = arith.muli %c0_i32_2, %c8_i32_3 : i32
    %10 = tpu.assume_multiple %9, 8 : i32
    %11 = arith.index_cast %10 : i32 to index
    %c0_4 = arith.constant 0 : index
    %12 = vector.load %arg3[%11, %c0_4] : memref<8x16xf32, #tpu.memory_space<vmem>>, vector<8x16xf32>
    %13 = arith.index_cast %10 : i32 to index
    %c0_5 = arith.constant 0 : index
    %14 = vector.load %arg4[%13, %c0_5] : memref<8x1xi32, #tpu.memory_space<vmem>>, vector<8x1xi32>
    %cst_6 = arith.constant dense<0xFF800000> : vector<8xf32>
    %15 = vector.multi_reduction <maximumf>, %12, %cst_6 [1] : vector<8x16xf32> to vector<8xf32>
    %16 = vector.shape_cast %15 : vector<8xf32> to vector<8x1xf32>
    %17 = tpu.iota {dimensions = array<i32: 1>} : vector<8x16xi32>
    %18 = vector.broadcast %16 : vector<8x1xf32> to vector<8x16xf32>
    %19 = arith.cmpf oeq, %12, %18 : vector<8x16xf32>
    %c16_i32 = arith.constant 16 : i32
    %20 = vector.broadcast %c16_i32 : i32 to vector<8x16xi32>
    %21 = arith.select %19, %17, %20 : vector<8x16xi1>, vector<8x16xi32>
    %cst_7 = arith.constant dense<2147483647> : vector<8xi32>
    %22 = vector.multi_reduction <minsi>, %21, %cst_7 [1] : vector<8x16xi32> to vector<8xi32>
    %23 = vector.shape_cast %22 : vector<8xi32> to vector<8x1xi32>
    %24 = vector.broadcast %16 : vector<8x1xf32> to vector<8x16xf32>
    %25 = arith.subf %12, %24 : vector<8x16xf32>
    %26 = vector.broadcast %4 : f32 to vector<8x16xf32>
    %27 = arith.mulf %25, %26 : vector<8x16xf32>
    %28 = math.exp %27 : vector<8x16xf32>
    %cst_8 = arith.constant dense<0.000000e+00> : vector<8xf32>
    %29 = vector.multi_reduction <add>, %28, %cst_8 [1] : vector<8x16xf32> to vector<8xf32>
    %30 = vector.shape_cast %29 : vector<8xf32> to vector<8x1xf32>
    %31 = tpu.reciprocal %30 : vector<8x1xf32> -> vector<8x1xf32>
    %32 = arith.cmpi eq, %23, %14 : vector<8x1xi32>
    %33 = arith.extui %32 : vector<8x1xi1> to vector<8x1xi32>
    %34 = arith.sitofp %33 : vector<8x1xi32> to vector<8x1xf32>
    %35 = arith.addi %7, %10 : i32
    %36 = tpu.iota {dimensions = array<i32: 0>} : vector<8x1xi32>
    %37 = vector.broadcast %35 : i32 to vector<8x1xi32>
    %38 = arith.addi %37, %36 : vector<8x1xi32>
    %c8_i32_9 = arith.constant 8 : i32
    %39 = vector.broadcast %c8_i32_9 : i32 to vector<8x1xi32>
    %40 = arith.cmpi slt, %38, %39 : vector<8x1xi32>
    %cst_10 = arith.constant 0.000000e+00 : f32
    %41 = vector.broadcast %cst_10 : f32 to vector<8x1xf32>
    %42 = arith.select %40, %31, %41 : vector<8x1xi1>, vector<8x1xf32>
    %cst_11 = arith.constant 0.000000e+00 : f32
    %43 = vector.broadcast %cst_11 : f32 to vector<8x1xf32>
    %44 = arith.select %40, %34, %43 : vector<8x1xi1>, vector<8x1xf32>
    %cst_12 = arith.constant dense<0.000000e+00> : vector<1xf32>
    %45 = vector.multi_reduction <add>, %44, %cst_12 [0] : vector<8x1xf32> to vector<1xf32>
    %46 = vector.shape_cast %45 : vector<1xf32> to vector<1x1xf32>
    %47 = arith.addf %8, %46 : vector<1x1xf32>
    %cst_13 = arith.constant dense<0.000000e+00> : vector<1xf32>
    %48 = vector.multi_reduction <add>, %42, %cst_13 [0] : vector<8x1xf32> to vector<1xf32>
    %49 = vector.shape_cast %48 : vector<1xf32> to vector<1x1xf32>
    %50 = arith.addf %8, %49 : vector<1x1xf32>
    %c1_i32_14 = arith.constant 1 : i32
    %c0_15 = arith.constant 0 : index
    %c0_16 = arith.constant 0 : index
    %51 = vector.load %arg7[%c0_15, %c0_16] : memref<1x1xf32, #tpu.memory_space<vmem>>, vector<1x1xf32>
    %52 = arith.addf %51, %47 : vector<1x1xf32>
    %c0_17 = arith.constant 0 : index
    %c0_18 = arith.constant 0 : index
    %53 = vector.load %arg7[%c0_17, %c0_18] : memref<1x1xf32, #tpu.memory_space<vmem>>, vector<1x1xf32>
    tpu.vector_store %arg7[%c0_17, %c0_18], %52 {strides = array<i32>} : memref<1x1xf32, #tpu.memory_space<vmem>>, vector<1x1xf32>,
    %c0_19 = arith.constant 0 : index
    %c0_20 = arith.constant 0 : index
    %54 = vector.load %arg8[%c0_19, %c0_20] : memref<1x1xf32, #tpu.memory_space<vmem>>, vector<1x1xf32>
    %55 = arith.addf %54, %50 : vector<1x1xf32>
    %c0_21 = arith.constant 0 : index
    %c0_22 = arith.constant 0 : index
    %56 = vector.load %arg8[%c0_21, %c0_22] : memref<1x1xf32, #tpu.memory_space<vmem>>, vector<1x1xf32>
    tpu.vector_store %arg8[%c0_21, %c0_22], %55 {strides = array<i32>} : memref<1x1xf32, #tpu.memory_space<vmem>>, vector<1x1xf32>,
    %c0_i32_23 = arith.constant 0 : i32
    %57 = arith.cmpi eq, %arg1, %c0_i32_23 : i32
    %58 = arith.extui %57 : i1 to i32
    %c0_i32_24 = arith.constant 0 : i32
    %59 = arith.cmpi ne, %58, %c0_i32_24 : i32
    scf.if %59 {
      %c0_25 = arith.constant 0 : index
      %c0_26 = arith.constant 0 : index
      %60 = vector.load %arg7[%c0_25, %c0_26] : memref<1x1xf32, #tpu.memory_space<vmem>>, vector<1x1xf32>
      %61 = vector.shape_cast %60 : vector<1x1xf32> to vector<1x1x1xf32>
      %c0_27 = arith.constant 0 : index
      %c0_28 = arith.constant 0 : index
      %c0_29 = arith.constant 0 : index
      %62 = vector.load %arg5[%c0_27, %c0_28, %c0_29] : memref<1x1x1xf32, #tpu.memory_space<vmem>>, vector<1x1x1xf32>
      tpu.vector_store %arg5[%c0_27, %c0_28, %c0_29], %61 {strides = array<i32>} : memref<1x1x1xf32, #tpu.memory_space<vmem>>, vector<1x1x1xf32>,
      %c0_30 = arith.constant 0 : index
      %c0_31 = arith.constant 0 : index
      %63 = vector.load %arg8[%c0_30, %c0_31] : memref<1x1xf32, #tpu.memory_space<vmem>>, vector<1x1xf32>
      %64 = vector.shape_cast %63 : vector<1x1xf32> to vector<1x1x1xf32>
      %c0_32 = arith.constant 0 : index
      %c0_33 = arith.constant 0 : index
      %c0_34 = arith.constant 0 : index
      %65 = vector.load %arg6[%c0_32, %c0_33, %c0_34] : memref<1x1x1xf32, #tpu.memory_space<vmem>>, vector<1x1x1xf32>
      tpu.vector_store %arg6[%c0_32, %c0_33, %c0_34], %64 {strides = array<i32>} : memref<1x1x1xf32, #tpu.memory_space<vmem>>, vector<1x1x1xf32>,
    } else {
    }
    return
  }
  func.func @transform_0(%arg0: i32, %arg1: i32) -> i32 {
    %c0_i32 = arith.constant 0 : i32
    %c0_i32_0 = arith.constant 0 : i32
    return %c0_i32 : i32
  }
  func.func @transform_1(%arg0: i32, %arg1: i32) -> (i32, i32) {
    %c1_i32 = arith.constant 1 : i32
    %0 = arith.muli %arg0, %c1_i32 : i32
    %1 = arith.addi %0, %arg1 : i32
    %c0_i32 = arith.constant 0 : i32
    %2 = arith.minsi %1, %c0_i32 : i32
    %c0_i32_0 = arith.constant 0 : i32
    %c0_i32_1 = arith.constant 0 : i32
    return %2, %c0_i32_0 : i32, i32
  }
  func.func @transform_2(%arg0: i32, %arg1: i32) -> (i32, i32) {
    %c1_i32 = arith.constant 1 : i32
    %0 = arith.muli %arg0, %c1_i32 : i32
    %1 = arith.addi %0, %arg1 : i32
    %c0_i32 = arith.constant 0 : i32
    %2 = arith.minsi %1, %c0_i32 : i32
    %c0_i32_0 = arith.constant 0 : i32
    %c0_i32_1 = arith.constant 0 : i32
    return %2, %c0_i32_0 : i32, i32
  }
  func.func @transform_3(%arg0: i32, %arg1: i32) -> (i32, i32, i32) {
    %c0_i32 = arith.constant 0 : i32
    %c0_i32_0 = arith.constant 0 : i32
    %c0_i32_1 = arith.constant 0 : i32
    return %arg0, %c0_i32, %c0_i32_0 : i32, i32, i32
  }
  func.func @transform_4(%arg0: i32, %arg1: i32) -> (i32, i32, i32) {
    %c0_i32 = arith.constant 0 : i32
    %c0_i32_0 = arith.constant 0 : i32
    %c0_i32_1 = arith.constant 0 : i32
    return %arg0, %c0_i32, %c0_i32_0 : i32, i32, i32
  }
}

</mosaic_0001>

<llo_original>
// kernel: tpu_custom_call.1
$region0: #{tpu_custom_call.1}
  #allocation0 [shape = 'u32[]', space=smem, size = 0x4, offset = 0x4, fixed_abs, tag = 'smem constant byte address 0x4 - core index']
  #allocation1 [shape = 'u32[72,128]{1,0:T(1,128)}', space=vmem, size = 0x9000, scoped, tag = 'internal scratch']
  #allocation2 [shape = 'f32[1,1]{1,0:T(1,128)}', space=vmem, size = 0x200, scoped, tag = 'scratch operand']
  #allocation3 [shape = 'f32[1,1]{1,0:T(1,128)}', space=vmem, size = 0x200, scoped, tag = 'scratch operand']
  #allocation4 [shape = 'f32[1]{0:T(128)S(6)}', space=smem, size = 0x200, scoped, tag = 'scoped memory for tpu_custom_call.1']
  %s0 = inlined_call_operand.<no memory space> [shape: f32[1], index: 0, kind: input, shape index: {}]
  %s1 = inlined_call_operand.vmem [shape: f32[8,16], index: 1, kind: input, shape index: {}]
  %s2 = inlined_call_operand.vmem [shape: s32[8,1], index: 2, kind: input, shape index: {}]
  %s3 = inlined_call_operand.hbm [shape: f32[1,1,1], index: 3, kind: output, shape index: {0}]
  %s4 = inlined_call_operand.hbm [shape: f32[1,1,1], index: 4, kind: output, shape index: {1}]
  %5 = xla_tuple %s3, %s4
  %s6 = sld [smem:[#allocation0]]
  $region38: #{tpu_custom_call.1} parent=0
    _
  %s8 = ssub.s32 1, %s6
  %s9 = scalar_select 0, %s8, %s6
  %10 = sst [smem:[#allocation4]] %s0
  $region1: #{tpu_custom_call.1} parent=0
    #allocation5 [shape = 'u8[512]{0}', space=vmem, size = 0x400, scoped, tag = 'output window, operand 0, single buffered']
    #allocation6 [shape = 's32[1]{0}', space=sflag, size = 0x4, scoped, tag = 'scoped memory for tpu_custom_call.1']
    #allocation7 [shape = 'u8[512]{0}', space=vmem, size = 0x400, scoped, tag = 'output window, operand 1, single buffered']
    #allocation8 [shape = 's32[1]{0}', space=sflag, size = 0x4, scoped, tag = 'scoped memory for tpu_custom_call.1']
    %11 = vsyncpa [#allocation6], 0
    %12 = vsyncpa [#allocation8], 0
    // Predicated region
    $region2: #{tpu_custom_call.1} parent=1 // pred_check
      _
    $region3: #{tpu_custom_call.1} parent=1 // pred_check_branch
      %14 = sbr.rel (0) target = $region5
    $region4: #{tpu_custom_call.1} parent=1 // pred_region
      _
    $region5: #{tpu_custom_call.1} parent=1 // pred_fallthru
      _
    // Predicated region
    $region6: #{tpu_custom_call.1} parent=1 // pred_check
      _
    $region7: #{tpu_custom_call.1} parent=1 // pred_check_branch
      %16 = sbr.rel (0) target = $region9
    $region8: #{tpu_custom_call.1} parent=1 // pred_region
      %s17 = sadd.s32 0, 0
      %p18 = scmp.lt.s32.totalorder %s17, 0
      %s19 = scalar_select %p18, %s17, 0
      %p20 = scmp.lt.s32.totalorder %s19, 0
      %s21 = scalar_select %p20, %s19, 0
      %s22 = smul.addr %s21, 8
      %s23 = scalar_lea.vmem %s1, %s22
      %s24 = sadd.s32 0, 0
      %p25 = scmp.lt.s32.totalorder %s24, 0
      %s26 = scalar_select %p25, %s24, 0
    $region9: #{tpu_custom_call.1} parent=1 // pred_fallthru
      _
    // Predicated region
    $region10: #{tpu_custom_call.1} parent=1 // pred_check
      _
    $region11: #{tpu_custom_call.1} parent=1 // pred_check_branch
      %28 = sbr.rel (0) target = $region13
    $region12: #{tpu_custom_call.1} parent=1 // pred_region
      %s29 = sadd.s32 0, 0
      %p30 = scmp.lt.s32.totalorder %s29, 0
      %s31 = scalar_select %p30, %s29, 0
      %p32 = scmp.lt.s32.totalorder %s31, 0
      %s33 = scalar_select %p32, %s31, 0
      %s34 = smul.addr %s33, 8
      %s35 = scalar_lea.vmem %s2, %s34
      %s36 = sadd.s32 0, 0
      %p37 = scmp.lt.s32.totalorder %s36, 0
      %s38 = scalar_select %p37, %s36, 0
    $region13: #{tpu_custom_call.1} parent=1 // pred_fallthru
      _
    %s39 = sadd.s32 0, 0
    %p40 = scmp.lt.s32.totalorder %s39, 0
    %s41 = scalar_select %p40, %s39, 0
    %p42 = scmp.lt.s32.totalorder %s41, 0
    %s43 = scalar_select %p42, %s41, 0
    %s44 = smul.addr %s43, 8
    %s45 = scalar_lea.vmem %s1, %s44
    %s46 = sadd.s32 0, 0
    %p47 = scmp.lt.s32.totalorder %s46, 0
    %s48 = scalar_select %p47, %s46, 0
    %p49 = scmp.lt.s32.totalorder %s48, 0
    %s50 = scalar_select %p49, %s48, 0
    %s51 = smul.addr %s50, 8
    %s52 = scalar_lea.vmem %s2, %s51
    %s53 = sadd.s32 0, 0
    %p54 = scmp.lt.s32.totalorder %s53, 0
    %s55 = scalar_select %p54, %s53, 0
    %p56 = scmp.lt.s32.totalorder %s55, 0
    %s57 = scalar_select %p56, %s55, 0
    %s58 = smul.addr %s57, 8
    %s59 = scalar_lea.vmem %s1, %s58
    %s60 = sadd.s32 0, 0
    %p61 = scmp.lt.s32.totalorder %s60, 0
    %s62 = scalar_select %p61, %s60, 0
    %s63 = sadd.s32 0, 0
    %p64 = scmp.lt.s32.totalorder %s63, 0
    %s65 = scalar_select %p64, %s63, 0
    %p66 = scmp.lt.s32.totalorder %s65, 0
    %s67 = scalar_select %p66, %s65, 0
    %s68 = smul.addr %s67, 8
    %s69 = scalar_lea.vmem %s2, %s68
    %s70 = sadd.s32 0, 0
    %p71 = scmp.lt.s32.totalorder %s70, 0
    %s72 = scalar_select %p71, %s70, 0
    %p73 = scmp.eq.s32.totalorder 0, 0
    // Predicated region
    $region14: #{tpu_custom_call.1} parent=1 // pred_check
      %p74 = pneg %p73
    $region15: #{tpu_custom_call.1} parent=1 // pred_check_branch
      %76 = sbr.rel (%p74) target = $region17
    $region16: #{tpu_custom_call.1} parent=1 // pred_region
      %vm77 = vcmask 0
      %78 = vst.msk [vmem:[#allocation2] sm:$0x1] %vm77, 0.0
      %79 = vst.msk [vmem:[#allocation3] sm:$0x1] %vm77, 0.0
    $region17: #{tpu_custom_call.1} parent=1 // pred_fallthru
      _
    %s80 = sld [smem:[#allocation4]]
    %v81 = vstv %s80
    %v82 = vrcp.pop %v81
    %v83 = vmul.f32 %v81, %v82
    %v84 = vsub.f32 1.0, %v83
    %v85 = vmul.f32 %v82, %v84
    %v86 = vadd.f32 %v82, %v85
    %vm87 = vweird.f32 %v81
    %vm88 = vweird.f32 %v82
    %vm89 = vmor %vm87, %vm88
    %v90 = vsel %vm89, %v82, %v86
    %v91 = vand.u32 2147483647, %v81
    %vm92 = vcmp.eq.f32.partialorder %v91, 8.507059e+37
    %v93 = vand.u32 %v81, 2147483648
    %v94 = vor.u32 1.1754944e-38, %v93
    %v95 = vsel %vm92, %v94, %v90
    %s96 = vtos %v95
    %s97 = sadd.s32 0, 0
    %s98 = smul.u32 %s97, 8
    %v99 = vld [vmem:[%s59] sm:$0xff]
    %v100 = vld [vmem:[%s69] sm:$0xff]
    %vm101 = vcmask 130048
    %v102 = vsel %vm101, %v99, -inf
    %103 = vmax.xlane.f32.xlu0 %v102
    %v104 = vpop.xlane.xlu0 %103
    %v105 = vlaneseq
    %v106 = vand.u32 %v105, 127
    %vm107 = vcmp.eq.f32.partialorder %v99, %v104
    %v108 = vsel %vm107, %v106, 16
    %v109 = vsel %vm101, %v108, 2147483647
    %v110 = vand.u32 %v109, 65535
    %v111 = vshra.s32 %v109, 16
    %v112 = vcvt.s32.f32 %v110
    %v113 = vcvt.s32.f32 %v111
    %114 = vmin.xlane.f32.xlu0 %v113
    %v115 = vpop.xlane.xlu0 %114
    %vm116 = vcmp.eq.f32.partialorder %v113, %v115
    %v117 = vsel %vm116, %v112, inf
    %118 = vmin.xlane.f32.xlu0 %v117
    %v119 = vpop.xlane.xlu0 %118
    %v120 = vcvt.f32.s32 %v119
    %v121 = vcvt.f32.s32 %v115
    %v122 = vshll.u32 %v121, 16
    %v123 = vadd.s32 %v122, %v120
    %v124 = vsub.f32 %v99, %v104
    %v125 = vstv %s96
    %v126 = vmul.f32 %v124, %v125
    %v127 = vmul.f32 %v126, 1.442695
    %v128 = vpow.pop %v127
    %v129 = vsel %vm101, %v128, 0.0
    %130 = vadd.xlane.f32.xlu0 %v129
    %v131 = vpop.xlane.xlu0 %130
    %v132 = vrcp.pop %v131
    %v133 = vmul.f32 %v131, %v132
    %v134 = vsub.f32 1.0, %v133
    %v135 = vmul.f32 %v132, %v134
    %v136 = vadd.f32 %v132, %v135
    %vm137 = vweird.f32 %v131
    %vm138 = vweird.f32 %v132
    %vm139 = vmor %vm137, %vm138
    %v140 = vsel %vm139, %v132, %v136
    %v141 = vand.u32 2147483647, %v131
    %vm142 = vcmp.eq.f32.partialorder %v141, 8.507059e+37
    %v143 = vand.u32 %v131, 2147483648
    %v144 = vor.u32 1.1754944e-38, %v143
    %v145 = vsel %vm142, %v144, %v140
    %vm146 = vcmp.eq.s32.totalorder %v123, %v100
    %v147 = vsel %vm146, 1, 0
    %v148 = vcvt.s32.f32 %v147
    %s149 = sadd.s32 %s98, 0
    %v150 = vlaneseq
    %v151 = vshrl.u32 %v150, 7
    %v152 = vstv %s149
    %v153 = vadd.s32 %v152, %v151
    %vm154 = vcmp.lt.s32.totalorder %v153, 8
    %v155 = vsel %vm154, %v145, 0.0
    %v156 = vsel %vm154, %v148, 0.0
    %vm157 = vcmask 7168
    %v158 = vsel %vm157, %v156, 0.0
    %v159 = vrot.slane %v158, 4
    %v160 = vadd.f32 %v158, %v159
    %v161 = vrot.slane %v160, 2
    %v162 = vadd.f32 %v160, %v161
    %v163 = vrot.slane %v162, 1
    %v164 = vadd.f32 %v162, %v163
    %v165 = vadd.f32 %v164, 0.0
    %v166 = vrot.slane %v155, 4
    %v167 = vadd.f32 %v155, %v166
    %v168 = vrot.slane %v167, 2
    %v169 = vadd.f32 %v167, %v168
    %v170 = vrot.slane %v169, 1
    %v171 = vadd.f32 %v169, %v170
    %v172 = vadd.f32 %v171, 0.0
    %v173 = vld [vmem:[#allocation2] sm:$0x1]
    %v174 = vadd.f32 %v173, %v165
    %vm175 = vcmask 0
    %176 = vst.msk [vmem:[#allocation2] sm:$0x1] %vm175, %v174
    %v177 = vld [vmem:[#allocation3] sm:$0x1]
    %v178 = vadd.f32 %v177, %v172
    %179 = vst.msk [vmem:[#allocation3] sm:$0x1] %vm175, %v178
    // Predicated region
    $region18: #{tpu_custom_call.1} parent=1 // pred_check
      %p180 = pneg %p73
    $region19: #{tpu_custom_call.1} parent=1 // pred_check_branch
      %182 = sbr.rel (%p180) target = $region21
    $region20: #{tpu_custom_call.1} parent=1 // pred_region
      %v183 = vld [vmem:[#allocation2] sm:$0x1]
      %184 = vst.msk [vmem:[#allocation5] sm:$0x1] %vm175, %v183
      %v185 = vld [vmem:[#allocation3] sm:$0x1]
      %186 = vst.msk [vmem:[#allocation7] sm:$0x1] %vm175, %v185
    $region21: #{tpu_custom_call.1} parent=1 // pred_fallthru
      _
    // Predicated region
    $region22: #{tpu_custom_call.1} parent=1 // pred_check
      _
    $region23: #{tpu_custom_call.1} parent=1 // pred_check_branch
      %188 = sbr.rel (0) target = $region25
    $region24: #{tpu_custom_call.1} parent=1 // pred_region
      %190 = vsyncadd [#allocation6], 0
      %s192 = sshll.u32 [#allocation5], 4
      %s193 = int_to_ptr.vmem [resolvable:$true] %s192
      %s194 = sshll.u32 %s3, 4
      %s195 = int_to_ptr.hbm [resolvable:$true] %s194
      %197 = dma.vmem_to_hbm [thread:$0]  %s193, 16, %s195, [#allocation6]
    $region25: #{tpu_custom_call.1} parent=1 // pred_fallthru
      _
    // Predicated region
    $region26: #{tpu_custom_call.1} parent=1 // pred_check
      _
    $region27: #{tpu_custom_call.1} parent=1 // pred_check_branch
      %199 = sbr.rel (0) target = $region29
    $region28: #{tpu_custom_call.1} parent=1 // pred_region
      %201 = vsyncadd [#allocation8], 0
      %s203 = sshll.u32 [#allocation7], 4
      %s204 = int_to_ptr.vmem [resolvable:$true] %s203
      %s205 = sshll.u32 %s4, 4
      %s206 = int_to_ptr.hbm [resolvable:$true] %s205
      %208 = dma.vmem_to_hbm [thread:$0]  %s204, 16, %s206, [#allocation8]
    $region29: #{tpu_custom_call.1} parent=1 // pred_fallthru
      _
    // Predicated region
    $region30: #{tpu_custom_call.1} parent=1 // pred_check
      _
    $region31: #{tpu_custom_call.1} parent=1 // pred_check_branch
      %210 = sbr.rel (0) target = $region33
    $region32: #{tpu_custom_call.1} parent=1 // pred_region
      %212 = dma.done [#allocation6], 16
    $region33: #{tpu_custom_call.1} parent=1 // pred_fallthru
      _
    // Predicated region
    $region34: #{tpu_custom_call.1} parent=1 // pred_check
      _
    $region35: #{tpu_custom_call.1} parent=1 // pred_check_branch
      %214 = sbr.rel (0) target = $region37
    $region36: #{tpu_custom_call.1} parent=1 // pred_region
      %216 = dma.done [#allocation8], 16
    $region37: #{tpu_custom_call.1} parent=1 // pred_fallthru
      _
    %217 = vsyncpa [#allocation6], 1
    %218 = vsyncpa [#allocation8], 1

</llo_original>
